<compile_context>
chip_gen: v5e
topology: v5e:2x2
jax: 0.10.0
libtpu: 0.0.40
codegen_flags: <defaults>
</compile_context>

<pallas_src>
import jax
import jax.numpy as jnp
from jax.experimental import pallas as pl
from jax.experimental.pallas import tpu as pltpu


def _round_up(x, m):
    return ((x + m - 1) // m) * m


def _cdiv(a, b):
    return (a + b - 1) // b


def _vmem_capacity_bytes():
    """Physical VMEM of the current chip; conservative 64 MiB fallback (v7x)."""
    try:
        info = pltpu.get_tpu_info()
        cap = getattr(info, "vmem_capacity_bytes", None)
        if cap:
            return int(cap)
    except Exception:
        pass
    return 64 << 20


def _const_spec(shape):
    """Weights/biases: constant block index -> never re-DMA'd.  Single-buffer
    them when the API allows so we don't hold a dead duplicate copy in VMEM."""
    idx = lambda i: (0, 0)
    try:
        return pl.BlockSpec(shape, idx, pipeline_mode=pl.Buffered(1))
    except Exception:
        return pl.BlockSpec(shape, idx)


def _gru_obs_kernel(x_ref, h_ref, p_ref, m_ref,
                    wi_ref, wh_ref,
                    br_ref, bz_ref, bin_ref, bhn_ref,
                    hnew_ref, loss_ref):
    x = x_ref[...]            # (TB, Dp) bf16
    h = h_ref[...]            # (TB, Hp) bf16

    # losses = |X_obs - p_obs| * M_obs  (VPU, f32 math on bf16-streamed inputs).
    xf = x.astype(jnp.float32)
    loss_ref[...] = (jnp.abs(xf - p_ref[...].astype(jnp.float32))
                     * m_ref[...].astype(jnp.float32))

    Hp = hnew_ref.shape[-1]

    # Fused gate GEMMs: bf16 operands on the MXU, f32 accumulation.
    gi = jnp.dot(x, wi_ref[...], preferred_element_type=jnp.float32)   # (TB, 3Hp)
    gh = jnp.dot(h, wh_ref[...], preferred_element_type=jnp.float32)   # (TB, 3Hp)

    # Gate math in f32 (matches torch.nn.GRUCell; v5e VPU/EUP have no bf16).
    r = jax.nn.sigmoid(gi[:, 0:Hp] + gh[:, 0:Hp] + br_ref[...])
    z = jax.nn.sigmoid(gi[:, Hp:2 * Hp] + gh[:, Hp:2 * Hp] + bz_ref[...])
    n = jnp.tanh(gi[:, 2 * Hp:] + bin_ref[...]
                 + r * (gh[:, 2 * Hp:] + bhn_ref[...]))

    hf = h.astype(jnp.float32)
    # h' = (1 - z) * n + z * h  ==  n + z * (h - n)
    hnew_ref[...] = (n + z * (hf - n)).astype(hnew_ref.dtype)


@jax.jit
def gru_obs_cell(h, p, X_obs, M_obs, i_obs, fused_params):
    """Pallas-backed GRUObsCell.forward. Returns (h_updated, losses)."""
    Wi, Wh, b_r, b_z, b_in, b_hn = fused_params

    n_obs, D = X_obs.shape
    N, H = h.shape
    Dp = Wi.shape[0]
    Hp = Wi.shape[1] // 3

    if n_obs == 0:            # degenerate: nothing observed this step
        return h, jnp.zeros_like(X_obs)

    # ---- gather (glue, plain JAX) --------------------------------------------
    # TODO(synk): in-kernel gather/scatter (scalar-prefetched i_obs + manual DMA
    # + input_output_aliases) to avoid these extra HBM passes and the full-h
    # copy done by the scatter below.
    h_obs = jnp.take(h, i_obs, axis=0)
    p_obs = jnp.take(p, i_obs, axis=0)

    # ---- batch tile from a per-generation VMEM budget -------------------------
    cap = _vmem_capacity_bytes()
    budget = max(min(cap - (16 << 20), 100 << 20), 24 << 20)

    weight_bytes = (Dp + Hp) * 3 * Hp * 2 + 4 * Hp * 4            # single-buffered
    per_row = 2 * ((3 * Dp + Hp) * 2 + Hp * 2 + Dp * 4)           # dbl-buffered tiles
    scratch_row = 2 * 3 * Hp * 4 + 6 * Hp * 4 + 2 * Dp * 4        # gi/gh + gate temps
    row_bytes = per_row + scratch_row

    avail = max(budget - weight_bytes - (4 << 20), 16 * row_bytes)
    tb_cap = max(16, min(1024, (avail // row_bytes) // 16 * 16))

    if n_obs <= 16:
        TB = 16                                   # minimum bf16-packed row tile
    else:
        # >=2 grid steps so v7x's second TensorCore is used; cdiv-based TB keeps
        # trailing-row padding to at most one sublane-group-ish of waste.
        tiles = max(2, _cdiv(n_obs, tb_cap))
        TB = max(16, min(tb_cap, _round_up(_cdiv(n_obs, tiles), 16)))
    grid_n = _cdiv(n_obs, TB)
    N_pad = grid_n * TB

    # ---- pad + bf16 cast fused on the host (one XLA fusion per input) ---------
    def pad_cast(a, rows, cols):
        a = a.astype(jnp.bfloat16)
        return jnp.pad(a, ((0, rows - a.shape[0]), (0, cols - a.shape[1])))

    x_p = pad_cast(X_obs, N_pad, Dp)
    h_p = pad_cast(h_obs, N_pad, Hp)
    p_p = pad_cast(p_obs, N_pad, Dp)
    m_p = pad_cast(M_obs, N_pad, Dp)

    row_spec_d = pl.BlockSpec((TB, Dp), lambda i: (i, 0))
    row_spec_h = pl.BlockSpec((TB, Hp), lambda i: (i, 0))

    # Advisory cost estimate for XLA scheduling around the kernel.
    flops = 2 * N_pad * (Dp + Hp) * 3 * Hp
    transcendentals = 3 * N_pad * Hp
    bytes_accessed = (N_pad * (3 * Dp + Hp) * 2        # bf16 activation inputs
                      + weight_bytes                    # bf16 weights + f32 biases
                      + N_pad * Hp * 2                  # bf16 h_new
                      + N_pad * Dp * 4)                 # f32 losses

    # vmem limit tied to the chosen TB (TB was sized to fit the budget).
    vmem_limit = int(min(max(weight_bytes + TB * row_bytes + (8 << 20), 32 << 20),
                         cap - (2 << 20)))

    h_new_p, loss_p = pl.pallas_call(
        _gru_obs_kernel,
        out_shape=(jax.ShapeDtypeStruct((N_pad, Hp), jnp.bfloat16),
                   jax.ShapeDtypeStruct((N_pad, Dp), jnp.float32)),
        grid=(grid_n,),
        in_specs=[row_spec_d, row_spec_h, row_spec_d, row_spec_d,
                  _const_spec(Wi.shape), _const_spec(Wh.shape),
                  _const_spec(b_r.shape), _const_spec(b_z.shape),
                  _const_spec(b_in.shape), _const_spec(b_hn.shape)],
        out_specs=(row_spec_h, row_spec_d),
        compiler_params=pltpu.CompilerParams(
            dimension_semantics=("parallel",),
            vmem_limit_bytes=vmem_limit),
        cost_estimate=pl.CostEstimate(
            flops=flops, transcendentals=transcendentals,
            bytes_accessed=bytes_accessed),
    )(x_p, h_p, p_p, m_p, Wi, Wh, b_r, b_z, b_in, b_hn)

    h_new_obs = h_new_p[:n_obs] if Hp == H else h_new_p[:n_obs, :H]
    losses = (loss_p[:n_obs] if Dp == D else loss_p[:n_obs, :D]).astype(X_obs.dtype)

    # ---- scatter (glue, plain JAX):  temp = h.clone(); temp[i_obs] = gru(...) --
    # NOTE: duplicate indices in i_obs have unspecified winner order (same as torch).
    h_out = h.at[i_obs].set(h_new_obs.astype(h.dtype))
    return h_out, losses


def init_gru_params(key, input_size, hidden_size, dtype=jnp.float32):
    """Deterministic init matching torch.nn.GRUCell parameter shapes.

    Returns (fused_params, raw_params):
      fused_params : lane-padded, gate-fused bf16 weights + folded f32 biases
                     consumed by the Pallas kernel.
      raw_params   : original torch-layout f32 (w_ih, w_hh, b_ih, b_hh) for the
                     pure-JAX reference.
    """
    H, D = hidden_size, input_size
    k = 1.0 / (H ** 0.5)
    keys = jax.random.split(key, 4)
    w_ih = jax.random.uniform(keys[0], (3 * H, D), dtype, -k, k)   # gates (r,z,n)
    w_hh = jax.random.uniform(keys[1], (3 * H, H), dtype, -k, k)
    b_ih = jax.random.uniform(keys[2], (3 * H,), dtype, -k, k)
    b_hh = jax.random.uniform(keys[3], (3 * H,), dtype, -k, k)
    raw = (w_ih, w_hh, b_ih, b_hh)

    Dp = _round_up(D, 128)
    Hp = _round_up(H, 128)

    def pad_gate_w(w_gate, rows, rows_p):
        # torch per-gate weight (H, rows) -> (rows, H) -> zero-pad to (rows_p, Hp)
        wt = w_gate.T
        return jnp.pad(wt, ((0, rows_p - rows), (0, Hp - H)))

    Wi = jnp.concatenate(
        [pad_gate_w(w_ih[g * H:(g + 1) * H], D, Dp) for g in range(3)],
        axis=1).astype(jnp.bfloat16)                               # (Dp, 3Hp)
    Wh = jnp.concatenate(
        [pad_gate_w(w_hh[g * H:(g + 1) * H], H, Hp) for g in range(3)],
        axis=1).astype(jnp.bfloat16)                               # (Hp, 3Hp)

    def pad_b(b):
        return jnp.pad(b, (0, Hp - H))[None, :].astype(jnp.float32)   # (1, Hp)

    b_r = pad_b(b_ih[0:H] + b_hh[0:H])          # folded r bias
    b_z = pad_b(b_ih[H:2 * H] + b_hh[H:2 * H])  # folded z bias
    b_in = pad_b(b_ih[2 * H:3 * H])             # kept separate (n gate)
    b_hn = pad_b(b_hh[2 * H:3 * H])

    fused = (Wi, Wh, b_r, b_z, b_in, b_hn)
    return fused, raw


def gru_obs_cell_ref(h, p, X_obs, M_obs, i_obs, raw_params):
    """Pure-JAX f32 reference matching the PyTorch module."""
    w_ih, w_hh, b_ih, b_hh = raw_params
    H = h.shape[1]
    p_obs = p[i_obs]
    losses = jnp.abs(X_obs - p_obs) * M_obs
    h_obs = h[i_obs]
    gi = X_obs @ w_ih.T + b_ih
    gh = h_obs @ w_hh.T + b_hh
    r = jax.nn.sigmoid(gi[:, 0:H] + gh[:, 0:H])
    z = jax.nn.sigmoid(gi[:, H:2 * H] + gh[:, H:2 * H])
    n = jnp.tanh(gi[:, 2 * H:] + r * gh[:, 2 * H:])
    h_new = (1.0 - z) * n + z * h_obs
    return h.at[i_obs].set(h_new), losses


if __name__ == "__main__":
    key = jax.random.PRNGKey(0)
    N, n_obs = 8, 4
    input_size, hidden_size = 16, 32

    k_h, k_p, k_x, k_m, k_par = jax.random.split(key, 5)
    h = jax.random.normal(k_h, (N, hidden_size), jnp.float32)
    p = jax.random.normal(k_p, (N, input_size), jnp.float32)
    X_obs = jax.random.normal(k_x, (n_obs, input_size), jnp.float32)
    M_obs = (jax.random.uniform(k_m, (n_obs, input_size)) > 0.5).astype(jnp.float32)
    i_obs = jnp.array([0, 2, 5, 7], dtype=jnp.int32)

    fused_params, raw_params = init_gru_params(k_par, input_size, hidden_size)

    h_out, losses = gru_obs_cell(h, p, X_obs, M_obs, i_obs, fused_params)
    jax.block_until_ready((h_out, losses))

    h_exp, loss_exp = gru_obs_cell_ref(h, p, X_obs, M_obs, i_obs, raw_params)

    assert h_out.shape == (N, hidden_size)
    assert losses.shape == (n_obs, input_size)
    # Loss inputs are streamed as bf16 (bandwidth-bound kernel) -> bf16-rounding
    # tolerance vs the f32 reference.
    assert jnp.allclose(losses, loss_exp, atol=3e-2, rtol=3e-2)
    # bf16 MXU operands / bf16 h_new output vs f32 reference -> loose tolerance.
    assert jnp.allclose(h_out, h_exp, atol=5e-2, rtol=5e-2)
    print("KERNEL_OK")
</pallas_src>

<mosaic_0001>
module attributes {stable_mosaic.version = 11 : i64} {
  func.func @_gru_obs_kernel(%arg0: i32, %arg1: memref<16x128xbf16, #tpu.memory_space<vmem>>, %arg2: memref<16x128xbf16, #tpu.memory_space<vmem>>, %arg3: memref<16x128xbf16, #tpu.memory_space<vmem>>, %arg4: memref<16x128xbf16, #tpu.memory_space<vmem>>, %arg5: memref<128x384xbf16, #tpu.memory_space<vmem>>, %arg6: memref<128x384xbf16, #tpu.memory_space<vmem>>, %arg7: memref<1x128xf32, #tpu.memory_space<vmem>>, %arg8: memref<1x128xf32, #tpu.memory_space<vmem>>, %arg9: memref<1x128xf32, #tpu.memory_space<vmem>>, %arg10: memref<1x128xf32, #tpu.memory_space<vmem>>, %arg11: memref<16x128xbf16, #tpu.memory_space<vmem>>, %arg12: memref<16x128xf32, #tpu.memory_space<vmem>>) attributes {dimension_semantics = [#tpu.dimension_semantics<parallel>], iteration_bounds = array<i64: 1>, scalar_prefetch = 0 : i64, scratch_operands = 0 : i64, tpu.core_type = #tpu.core_type<tc>, window_params = [{transform_indices = @transform_0, window_bounds = array<i64: 16, 128>}, {transform_indices = @transform_1, window_bounds = array<i64: 16, 128>}, {transform_indices = @transform_2, window_bounds = array<i64: 16, 128>}, {transform_indices = @transform_3, window_bounds = array<i64: 16, 128>}, {pipeline_mode = #tpu.pipeline_mode<synchronous>, transform_indices = @transform_4, window_bounds = array<i64: 128, 384>}, {pipeline_mode = #tpu.pipeline_mode<synchronous>, transform_indices = @transform_5, window_bounds = array<i64: 128, 384>}, {pipeline_mode = #tpu.pipeline_mode<synchronous>, transform_indices = @transform_6, window_bounds = array<i64: 1, 128>}, {pipeline_mode = #tpu.pipeline_mode<synchronous>, transform_indices = @transform_7, window_bounds = array<i64: 1, 128>}, {pipeline_mode = #tpu.pipeline_mode<synchronous>, transform_indices = @transform_8, window_bounds = array<i64: 1, 128>}, {pipeline_mode = #tpu.pipeline_mode<synchronous>, transform_indices = @transform_9, window_bounds = array<i64: 1, 128>}, {transform_indices = @transform_10, window_bounds = array<i64: 16, 128>}, {transform_indices = @transform_11, window_bounds = array<i64: 16, 128>}]} {
    %c0 = arith.constant 0 : index
    %c0_0 = arith.constant 0 : index
    %0 = vector.load %arg1[%c0, %c0_0] : memref<16x128xbf16, #tpu.memory_space<vmem>>, vector<16x128xbf16>
    %c0_1 = arith.constant 0 : index
    %c0_2 = arith.constant 0 : index
    %1 = vector.load %arg2[%c0_1, %c0_2] : memref<16x128xbf16, #tpu.memory_space<vmem>>, vector<16x128xbf16>
    %2 = arith.extf %0 : vector<16x128xbf16> to vector<16x128xf32>
    %c0_3 = arith.constant 0 : index
    %c0_4 = arith.constant 0 : index
    %3 = vector.load %arg3[%c0_3, %c0_4] : memref<16x128xbf16, #tpu.memory_space<vmem>>, vector<16x128xbf16>
    %4 = arith.extf %3 : vector<16x128xbf16> to vector<16x128xf32>
    %5 = arith.subf %2, %4 : vector<16x128xf32>
    %6 = math.absf %5 : vector<16x128xf32>
    %c0_5 = arith.constant 0 : index
    %c0_6 = arith.constant 0 : index
    %7 = vector.load %arg4[%c0_5, %c0_6] : memref<16x128xbf16, #tpu.memory_space<vmem>>, vector<16x128xbf16>
    %8 = arith.extf %7 : vector<16x128xbf16> to vector<16x128xf32>
    %9 = arith.mulf %6, %8 : vector<16x128xf32>
    %c0_7 = arith.constant 0 : index
    %c0_8 = arith.constant 0 : index
    %10 = vector.load %arg12[%c0_7, %c0_8] : memref<16x128xf32, #tpu.memory_space<vmem>>, vector<16x128xf32>
    tpu.vector_store %arg12[%c0_7, %c0_8], %9 {strides = array<i32>} : memref<16x128xf32, #tpu.memory_space<vmem>>, vector<16x128xf32>,
    %c0_9 = arith.constant 0 : index
    %c0_10 = arith.constant 0 : index
    %11 = vector.load %arg5[%c0_9, %c0_10] : memref<128x384xbf16, #tpu.memory_space<vmem>>, vector<128x384xbf16>
    %cst = arith.constant dense<0.000000e+00> : vector<16x384xf32>
    %12 = tpu.matmul %0, %11, %cst {dimension_numbers = #tpu.dot_dimension_numbers<[1], [0], [0], [1], [0, 0, 1, 1], [], []>} : vector<16x128xbf16>, vector<128x384xbf16>, vector<16x384xf32> -> vector<16x384xf32>
    %c0_11 = arith.constant 0 : index
    %c0_12 = arith.constant 0 : index
    %13 = vector.load %arg6[%c0_11, %c0_12] : memref<128x384xbf16, #tpu.memory_space<vmem>>, vector<128x384xbf16>
    %cst_13 = arith.constant dense<0.000000e+00> : vector<16x384xf32>
    %14 = tpu.matmul %1, %13, %cst_13 {dimension_numbers = #tpu.dot_dimension_numbers<[1], [0], [0], [1], [0, 0, 1, 1], [], []>} : vector<16x128xbf16>, vector<128x384xbf16>, vector<16x384xf32> -> vector<16x384xf32>
    %15 = vector.extract_strided_slice %12 {offsets = [0, 0], sizes = [16, 128], strides = [1, 1]} : vector<16x384xf32> to vector<16x128xf32>
    %16 = vector.extract_strided_slice %14 {offsets = [0, 0], sizes = [16, 128], strides = [1, 1]} : vector<16x384xf32> to vector<16x128xf32>
    %17 = arith.addf %15, %16 : vector<16x128xf32>
    %c0_14 = arith.constant 0 : index
    %c0_15 = arith.constant 0 : index
    %18 = vector.load %arg7[%c0_14, %c0_15] : memref<1x128xf32, #tpu.memory_space<vmem>>, vector<1x128xf32>
    %19 = vector.broadcast %18 : vector<1x128xf32> to vector<16x128xf32>
    %20 = arith.addf %17, %19 : vector<16x128xf32>
    %21 = arith.negf %20 : vector<16x128xf32>
    %22 = math.exp %21 : vector<16x128xf32>
    %cst_16 = arith.constant 1.000000e+00 : f32
    %23 = vector.broadcast %cst_16 : f32 to vector<16x128xf32>
    %24 = arith.addf %23, %22 : vector<16x128xf32>
    %25 = arith.divf %23, %24 : vector<16x128xf32>
    %26 = vector.extract_strided_slice %12 {offsets = [0, 128], sizes = [16, 128], strides = [1, 1]} : vector<16x384xf32> to vector<16x128xf32>
    %27 = vector.extract_strided_slice %14 {offsets = [0, 128], sizes = [16, 128], strides = [1, 1]} : vector<16x384xf32> to vector<16x128xf32>
    %28 = arith.addf %26, %27 : vector<16x128xf32>
    %c0_17 = arith.constant 0 : index
    %c0_18 = arith.constant 0 : index
    %29 = vector.load %arg8[%c0_17, %c0_18] : memref<1x128xf32, #tpu.memory_space<vmem>>, vector<1x128xf32>
    %30 = vector.broadcast %29 : vector<1x128xf32> to vector<16x128xf32>
    %31 = arith.addf %28, %30 : vector<16x128xf32>
    %32 = arith.negf %31 : vector<16x128xf32>
    %33 = math.exp %32 : vector<16x128xf32>
    %cst_19 = arith.constant 1.000000e+00 : f32
    %34 = vector.broadcast %cst_19 : f32 to vector<16x128xf32>
    %35 = arith.addf %34, %33 : vector<16x128xf32>
    %36 = arith.divf %34, %35 : vector<16x128xf32>
    %37 = vector.extract_strided_slice %12 {offsets = [0, 256], sizes = [16, 128], strides = [1, 1]} : vector<16x384xf32> to vector<16x128xf32>
    %c0_20 = arith.constant 0 : index
    %c0_21 = arith.constant 0 : index
    %38 = vector.load %arg9[%c0_20, %c0_21] : memref<1x128xf32, #tpu.memory_space<vmem>>, vector<1x128xf32>
    %39 = vector.broadcast %38 : vector<1x128xf32> to vector<16x128xf32>
    %40 = arith.addf %37, %39 : vector<16x128xf32>
    %41 = vector.extract_strided_slice %14 {offsets = [0, 256], sizes = [16, 128], strides = [1, 1]} : vector<16x384xf32> to vector<16x128xf32>
    %c0_22 = arith.constant 0 : index
    %c0_23 = arith.constant 0 : index
    %42 = vector.load %arg10[%c0_22, %c0_23] : memref<1x128xf32, #tpu.memory_space<vmem>>, vector<1x128xf32>
    %43 = vector.broadcast %42 : vector<1x128xf32> to vector<16x128xf32>
    %44 = arith.addf %41, %43 : vector<16x128xf32>
    %45 = arith.mulf %25, %44 : vector<16x128xf32>
    %46 = arith.addf %40, %45 : vector<16x128xf32>
    %47 = math.tanh %46 : vector<16x128xf32>
    %48 = arith.extf %1 : vector<16x128xbf16> to vector<16x128xf32>
    %49 = arith.subf %48, %47 : vector<16x128xf32>
    %50 = arith.mulf %36, %49 : vector<16x128xf32>
    %51 = arith.addf %47, %50 : vector<16x128xf32>
    %52 = arith.truncf %51 : vector<16x128xf32> to vector<16x128xbf16>
    %c0_24 = arith.constant 0 : index
    %c0_25 = arith.constant 0 : index
    %53 = vector.load %arg11[%c0_24, %c0_25] : memref<16x128xbf16, #tpu.memory_space<vmem>>, vector<16x128xbf16>
    tpu.vector_store %arg11[%c0_24, %c0_25], %52 {strides = array<i32>} : memref<16x128xbf16, #tpu.memory_space<vmem>>, vector<16x128xbf16>,
    return
  }
  func.func @transform_0(%arg0: i32) -> (i32, i32) {
    %c0_i32 = arith.constant 0 : i32
    %c0_i32_0 = arith.constant 0 : i32
    return %arg0, %c0_i32 : i32, i32
  }
  func.func @transform_1(%arg0: i32) -> (i32, i32) {
    %c0_i32 = arith.constant 0 : i32
    %c0_i32_0 = arith.constant 0 : i32
    return %arg0, %c0_i32 : i32, i32
  }
  func.func @transform_2(%arg0: i32) -> (i32, i32) {
    %c0_i32 = arith.constant 0 : i32
    %c0_i32_0 = arith.constant 0 : i32
    return %arg0, %c0_i32 : i32, i32
  }
  func.func @transform_3(%arg0: i32) -> (i32, i32) {
    %c0_i32 = arith.constant 0 : i32
    %c0_i32_0 = arith.constant 0 : i32
    return %arg0, %c0_i32 : i32, i32
  }
  func.func @transform_4(%arg0: i32) -> (i32, i32) {
    %c0_i32 = arith.constant 0 : i32
    %c0_i32_0 = arith.constant 0 : i32
    %c0_i32_1 = arith.constant 0 : i32
    return %c0_i32, %c0_i32_0 : i32, i32
  }
  func.func @transform_5(%arg0: i32) -> (i32, i32) {
    %c0_i32 = arith.constant 0 : i32
    %c0_i32_0 = arith.constant 0 : i32
    %c0_i32_1 = arith.constant 0 : i32
    return %c0_i32, %c0_i32_0 : i32, i32
  }
  func.func @transform_6(%arg0: i32) -> (i32, i32) {
    %c0_i32 = arith.constant 0 : i32
    %c0_i32_0 = arith.constant 0 : i32
    %c0_i32_1 = arith.constant 0 : i32
    return %c0_i32, %c0_i32_0 : i32, i32
  }
  func.func @transform_7(%arg0: i32) -> (i32, i32) {
    %c0_i32 = arith.constant 0 : i32
    %c0_i32_0 = arith.constant 0 : i32
    %c0_i32_1 = arith.constant 0 : i32
    return %c0_i32, %c0_i32_0 : i32, i32
  }
  func.func @transform_8(%arg0: i32) -> (i32, i32) {
    %c0_i32 = arith.constant 0 : i32
    %c0_i32_0 = arith.constant 0 : i32
    %c0_i32_1 = arith.constant 0 : i32
    return %c0_i32, %c0_i32_0 : i32, i32
  }
  func.func @transform_9(%arg0: i32) -> (i32, i32) {
    %c0_i32 = arith.constant 0 : i32
    %c0_i32_0 = arith.constant 0 : i32
    %c0_i32_1 = arith.constant 0 : i32
    return %c0_i32, %c0_i32_0 : i32, i32
  }
  func.func @transform_10(%arg0: i32) -> (i32, i32) {
    %c0_i32 = arith.constant 0 : i32
    %c0_i32_0 = arith.constant 0 : i32
    return %arg0, %c0_i32 : i32, i32
  }
  func.func @transform_11(%arg0: i32) -> (i32, i32) {
    %c0_i32 = arith.constant 0 : i32
    %c0_i32_0 = arith.constant 0 : i32
    return %arg0, %c0_i32 : i32, i32
  }
}

</mosaic_0001>

<llo_original>
// kernel: gru_obs_cell.1
$region0: #{gru_obs_cell.1}
  #allocation0 [shape = 'u32[]', space=smem, size = 0x4, offset = 0x4, fixed_abs, tag = 'smem constant byte address 0x4 - core index']
  #allocation1 [shape = 'u32[72,128]{1,0:T(1,128)}', space=vmem, size = 0x9000, scoped, tag = 'internal scratch']
  %s0 = inlined_call_operand.vmem [shape: bf16[16,128], index: 0, kind: input, shape index: {}]
  %s1 = inlined_call_operand.vmem [shape: bf16[16,128], index: 1, kind: input, shape index: {}]
  %s2 = inlined_call_operand.vmem [shape: bf16[16,128], index: 2, kind: input, shape index: {}]
  %s3 = inlined_call_operand.vmem [shape: bf16[16,128], index: 3, kind: input, shape index: {}]
  %s4 = inlined_call_operand.hbm [shape: bf16[128,384], index: 4, kind: input, shape index: {}]
  %s5 = inlined_call_operand.hbm [shape: bf16[128,384], index: 5, kind: input, shape index: {}]
  %s6 = inlined_call_operand.vmem [shape: f32[1,128], index: 6, kind: input, shape index: {}]
  %s7 = inlined_call_operand.vmem [shape: f32[1,128], index: 7, kind: input, shape index: {}]
  %s8 = inlined_call_operand.vmem [shape: f32[1,128], index: 8, kind: input, shape index: {}]
  %s9 = inlined_call_operand.vmem [shape: f32[1,128], index: 9, kind: input, shape index: {}]
  %s10 = inlined_call_operand.vmem [shape: bf16[16,128], index: 10, kind: output, shape index: {0}]
  %s11 = inlined_call_operand.vmem [shape: f32[16,128], index: 11, kind: output, shape index: {1}]
  %12 = xla_tuple %s10, %s11
  %s13 = sld [smem:[#allocation0]]
  $region66: #{gru_obs_cell.1} parent=0
    _
  %s15 = ssub.s32 1, %s13
  %s16 = scalar_select 0, %s15, %s13
  $region1: #{gru_obs_cell.1} parent=0
    #allocation2 [shape = 'u8[98304]{0}', space=vmem, size = 0x18000, scoped, tag = 'input window, operand 4, single buffered']
    #allocation3 [shape = 's32[1]{0}', space=sflag, size = 0x4, scoped, tag = 'scoped memory for gru_obs_cell.1']
    #allocation4 [shape = 'u8[98304]{0}', space=vmem, size = 0x18000, scoped, tag = 'input window, operand 5, single buffered']
    #allocation5 [shape = 's32[1]{0}', space=sflag, size = 0x4, scoped, tag = 'scoped memory for gru_obs_cell.1']
    %17 = vsyncpa [#allocation3], 0
    %18 = vsyncpa [#allocation5], 0
    // Predicated region
    $region2: #{gru_obs_cell.1} parent=1 // pred_check
      _
    $region3: #{gru_obs_cell.1} parent=1 // pred_check_branch
      %20 = sbr.rel (0) target = $region5
    $region4: #{gru_obs_cell.1} parent=1 // pred_region
      _
    $region5: #{gru_obs_cell.1} parent=1 // pred_fallthru
      _
    // Predicated region
    $region6: #{gru_obs_cell.1} parent=1 // pred_check
      _
    $region7: #{gru_obs_cell.1} parent=1 // pred_check_branch
      %22 = sbr.rel (0) target = $region9
    $region8: #{gru_obs_cell.1} parent=1 // pred_region
      _
    $region9: #{gru_obs_cell.1} parent=1 // pred_fallthru
      _
    // Predicated region
    $region10: #{gru_obs_cell.1} parent=1 // pred_check
      _
    $region11: #{gru_obs_cell.1} parent=1 // pred_check_branch
      %24 = sbr.rel (0) target = $region13
    $region12: #{gru_obs_cell.1} parent=1 // pred_region
      _
    $region13: #{gru_obs_cell.1} parent=1 // pred_fallthru
      _
    // Predicated region
    $region14: #{gru_obs_cell.1} parent=1 // pred_check
      _
    $region15: #{gru_obs_cell.1} parent=1 // pred_check_branch
      %26 = sbr.rel (0) target = $region17
    $region16: #{gru_obs_cell.1} parent=1 // pred_region
      _
    $region17: #{gru_obs_cell.1} parent=1 // pred_fallthru
      _
    // Predicated region
    $region18: #{gru_obs_cell.1} parent=1 // pred_check
      _
    $region19: #{gru_obs_cell.1} parent=1 // pred_check_branch
      %28 = sbr.rel (0) target = $region21
    $region20: #{gru_obs_cell.1} parent=1 // pred_region
      %30 = vsyncadd [#allocation3], 0
      %s31 = sshll.u32 %s4, 4
      %s32 = int_to_ptr.hbm [resolvable:$true] %s31
      %s33 = sshll.u32 [#allocation2], 4
      %s34 = int_to_ptr.vmem [resolvable:$true] %s33
      %39 = dma.hbm_to_vmem [thread:$0]  %s32, 3072, %s34, [#allocation3], 192, 192, 12
    $region21: #{gru_obs_cell.1} parent=1 // pred_fallthru
      _
    // Predicated region
    $region22: #{gru_obs_cell.1} parent=1 // pred_check
      _
    $region23: #{gru_obs_cell.1} parent=1 // pred_check_branch
      %41 = sbr.rel (0) target = $region25
    $region24: #{gru_obs_cell.1} parent=1 // pred_region
      %43 = vsyncadd [#allocation5], 0
      %s44 = sshll.u32 %s5, 4
      %s45 = int_to_ptr.hbm [resolvable:$true] %s44
      %s46 = sshll.u32 [#allocation4], 4
      %s47 = int_to_ptr.vmem [resolvable:$true] %s46
      %52 = dma.hbm_to_vmem [thread:$0]  %s45, 3072, %s47, [#allocation5], 192, 192, 12
    $region25: #{gru_obs_cell.1} parent=1 // pred_fallthru
      _
    // Predicated region
    $region26: #{gru_obs_cell.1} parent=1 // pred_check
      _
    $region27: #{gru_obs_cell.1} parent=1 // pred_check_branch
      %54 = sbr.rel (0) target = $region29
    $region28: #{gru_obs_cell.1} parent=1 // pred_region
      _
    $region29: #{gru_obs_cell.1} parent=1 // pred_fallthru
      _
    // Predicated region
    $region30: #{gru_obs_cell.1} parent=1 // pred_check
      _
    $region31: #{gru_obs_cell.1} parent=1 // pred_check_branch
      %56 = sbr.rel (0) target = $region33
    $region32: #{gru_obs_cell.1} parent=1 // pred_region
      _
    $region33: #{gru_obs_cell.1} parent=1 // pred_fallthru
      _
    // Predicated region
    $region34: #{gru_obs_cell.1} parent=1 // pred_check
      _
    $region35: #{gru_obs_cell.1} parent=1 // pred_check_branch
      %58 = sbr.rel (0) target = $region37
    $region36: #{gru_obs_cell.1} parent=1 // pred_region
      _
    $region37: #{gru_obs_cell.1} parent=1 // pred_fallthru
      _
    // Predicated region
    $region38: #{gru_obs_cell.1} parent=1 // pred_check
      _
    $region39: #{gru_obs_cell.1} parent=1 // pred_check_branch
      %60 = sbr.rel (0) target = $region41
    $region40: #{gru_obs_cell.1} parent=1 // pred_region
      _
    $region41: #{gru_obs_cell.1} parent=1 // pred_fallthru
      _
    // Predicated region
    $region42: #{gru_obs_cell.1} parent=1 // pred_check
      _
    $region43: #{gru_obs_cell.1} parent=1 // pred_check_branch
      %62 = sbr.rel (0) target = $region45
    $region44: #{gru_obs_cell.1} parent=1 // pred_region
      %64 = dma.done [#allocation3], 3072
    $region45: #{gru_obs_cell.1} parent=1 // pred_fallthru
      _
    // Predicated region
    $region46: #{gru_obs_cell.1} parent=1 // pred_check
      _
    $region47: #{gru_obs_cell.1} parent=1 // pred_check_branch
      %66 = sbr.rel (0) target = $region49
    $region48: #{gru_obs_cell.1} parent=1 // pred_region
      %68 = dma.done [#allocation5], 3072
    $region49: #{gru_obs_cell.1} parent=1 // pred_fallthru
      _
    %v69 = vld [vmem:[%s0] sm:$0xf]
    %v70 = vld [vmem:[%s0 + $0x4] sm:$0xf]
    %v71 = vld [vmem:[%s1] sm:$0xf]
    %v72 = vld [vmem:[%s1 + $0x4] sm:$0xf]
    %v73 = vunpack.c.l.bf16 %v69
    %v74 = vunpack.c.l.bf16 %v70
    %v75 = vld [vmem:[%s2] sm:$0xf]
    %v76 = vld [vmem:[%s2 + $0x4] sm:$0xf]
    %v77 = vunpack.c.l.bf16 %v75
    %v78 = vunpack.c.l.bf16 %v76
    %v79 = vsub.f32 %v73, %v77
    %v80 = vsub.f32 %v74, %v78
    %v81 = vand.u32 2147483647, %v79
    %v82 = vand.u32 2147483647, %v80
    %v83 = vld [vmem:[%s3] sm:$0xf]
    %v84 = vld [vmem:[%s3 + $0x4] sm:$0xf]
    %v85 = vunpack.c.l.bf16 %v83
    %v86 = vunpack.c.l.bf16 %v84
    %v87 = vmul.f32 %v81, %v85
    %v88 = vmul.f32 %v82, %v86
    %89 = vst [vmem:[%s11] sm:$0xff] %v87
    %90 = vst [vmem:[%s11 + $0x8] sm:$0xff] %v88
    %v91 = vld [vmem:[#allocation2] sm:$0xff]
    %v92 = vld [vmem:[#allocation2 + $0x8] sm:$0xf]
    %v93 = vld [vmem:[#allocation2 + $0xc] sm:$0xff]
    %v94 = vld [vmem:[#allocation2 + $0x14] sm:$0xf]
    %v95 = vld [vmem:[#allocation2 + $0x18] sm:$0xff]
    %v96 = vld [vmem:[#allocation2 + $0x20] sm:$0xf]
    %v97 = vld [vmem:[#allocation2 + $0x24] sm:$0xff]
    %v98 = vld [vmem:[#allocation2 + $0x2c] sm:$0xf]
    %v99 = vld [vmem:[#allocation2 + $0x30] sm:$0xff]
    %v100 = vld [vmem:[#allocation2 + $0x38] sm:$0xf]
    %v101 = vld [vmem:[#allocation2 + $0x3c] sm:$0xff]
    %v102 = vld [vmem:[#allocation2 + $0x44] sm:$0xf]
    %v103 = vld [vmem:[#allocation2 + $0x48] sm:$0xff]
    %v104 = vld [vmem:[#allocation2 + $0x50] sm:$0xf]
    %v105 = vld [vmem:[#allocation2 + $0x54] sm:$0xff]
    %v106 = vld [vmem:[#allocation2 + $0x5c] sm:$0xf]
    %v107 = vld [vmem:[#allocation2 + $0x60] sm:$0xff]
    %v108 = vld [vmem:[#allocation2 + $0x68] sm:$0xf]
    %v109 = vld [vmem:[#allocation2 + $0x6c] sm:$0xff]
    %v110 = vld [vmem:[#allocation2 + $0x74] sm:$0xf]
    %v111 = vld [vmem:[#allocation2 + $0x78] sm:$0xff]
    %v112 = vld [vmem:[#allocation2 + $0x80] sm:$0xf]
    %v113 = vld [vmem:[#allocation2 + $0x84] sm:$0xff]
    %v114 = vld [vmem:[#allocation2 + $0x8c] sm:$0xf]
    %v115 = vld [vmem:[#allocation2 + $0x90] sm:$0xff]
    %v116 = vld [vmem:[#allocation2 + $0x98] sm:$0xf]
    %v117 = vld [vmem:[#allocation2 + $0x9c] sm:$0xff]
    %v118 = vld [vmem:[#allocation2 + $0xa4] sm:$0xf]
    %v119 = vld [vmem:[#allocation2 + $0xa8] sm:$0xff]
    %v120 = vld [vmem:[#allocation2 + $0xb0] sm:$0xf]
    %v121 = vld [vmem:[#allocation2 + $0xb4] sm:$0xff]
    %v122 = vld [vmem:[#allocation2 + $0xbc] sm:$0xf]
    %v125 = vunpack.c.l.b16 %v69
    %v126 = vunpack.c.l.b16 %v70
    %v127 = vpack.c.b16 %v126, %v125
    %v161 = vunpack.c.l.b16 %v91
    %v162 = vunpack.c.h.b16 %v91
    %v163 = vunpack.c.l.b16 %v92
    %v164 = vunpack.c.l.b16 %v93
    %v165 = vunpack.c.h.b16 %v93
    %v166 = vunpack.c.l.b16 %v94
    %v167 = vunpack.c.l.b16 %v95
    %v168 = vunpack.c.h.b16 %v95
    %v169 = vunpack.c.l.b16 %v96
    %v170 = vunpack.c.l.b16 %v97
    %v171 = vunpack.c.h.b16 %v97
    %v172 = vunpack.c.l.b16 %v98
    %v173 = vunpack.c.l.b16 %v99
    %v174 = vunpack.c.h.b16 %v99
    %v175 = vunpack.c.l.b16 %v100
    %v176 = vunpack.c.l.b16 %v101
    %v177 = vunpack.c.h.b16 %v101
    %v178 = vunpack.c.l.b16 %v102
    %v179 = vunpack.c.l.b16 %v103
    %v180 = vunpack.c.h.b16 %v103
    %v181 = vunpack.c.l.b16 %v104
    %v182 = vunpack.c.l.b16 %v105
    %v183 = vunpack.c.h.b16 %v105
    %v184 = vunpack.c.l.b16 %v106
    %v185 = vunpack.c.l.b16 %v107
    %v186 = vunpack.c.h.b16 %v107
    %v187 = vunpack.c.l.b16 %v108
    %v188 = vunpack.c.l.b16 %v109
    %v189 = vunpack.c.h.b16 %v109
    %v190 = vunpack.c.l.b16 %v110
    %v191 = vunpack.c.l.b16 %v111
    %v192 = vunpack.c.h.b16 %v111
    %v193 = vunpack.c.l.b16 %v112
    %v194 = vunpack.c.l.b16 %v113
    %v195 = vunpack.c.h.b16 %v113
    %v196 = vunpack.c.l.b16 %v114
    %v197 = vunpack.c.l.b16 %v115
    %v198 = vunpack.c.h.b16 %v115
    %v199 = vunpack.c.l.b16 %v116
    %v200 = vunpack.c.l.b16 %v117
    %v201 = vunpack.c.h.b16 %v117
    %v202 = vunpack.c.l.b16 %v118
    %v203 = vunpack.c.l.b16 %v119
    %v204 = vunpack.c.h.b16 %v119
    %v205 = vunpack.c.l.b16 %v120
    %v206 = vunpack.c.l.b16 %v121
    %v207 = vunpack.c.h.b16 %v121
    %v208 = vunpack.c.l.b16 %v122
    %v209 = vpack.c.b16 %v164, %v161
    %v210 = vpack.c.b16 %v165, %v162
    %v211 = vpack.c.b16 %v166, %v163
    %v212 = vpack.c.b16 %v170, %v167
    %v213 = vpack.c.b16 %v171, %v168
    %v214 = vpack.c.b16 %v172, %v169
    %v215 = vpack.c.b16 %v176, %v173
    %v216 = vpack.c.b16 %v177, %v174
    %v217 = vpack.c.b16 %v178, %v175
    %v218 = vpack.c.b16 %v182, %v179
    %v219 = vpack.c.b16 %v183, %v180
    %v220 = vpack.c.b16 %v184, %v181
    %v221 = vpack.c.b16 %v188, %v185
    %v222 = vpack.c.b16 %v189, %v186
    %v223 = vpack.c.b16 %v190, %v187
    %v224 = vpack.c.b16 %v194, %v191
    %v225 = vpack.c.b16 %v195, %v192
    %v226 = vpack.c.b16 %v196, %v193
    %v227 = vpack.c.b16 %v200, %v197
    %v228 = vpack.c.b16 %v201, %v198
    %v229 = vpack.c.b16 %v202, %v199
    %v230 = vpack.c.b16 %v206, %v203
    %v231 = vpack.c.b16 %v207, %v204
    %v232 = vpack.c.b16 %v208, %v205
    %257 = vmatpush.bf16.msra.mxu0 %v230
    %258 = vmatpush.bf16.msra.mxu0 %v227
    %259 = vmatpush.bf16.msra.mxu0 %v224
    %260 = vmatpush.bf16.msra.mxu0 %v221
    %261 = vmatpush.bf16.msra.mxu0 %v218
    %262 = vmatpush.bf16.msra.mxu0 %v215
    %263 = vmatpush.bf16.msra.mxu0 %v212
    %264 = vmatpush.bf16.msra.mxu0 %v209
    %265 = vmatmul.bf16.gmra.mxu0 %v127
    %v266 = vpop.f32.mrf.mxu0
    %v267 = vadd.f32 0.0, %v266
    %v268 = vpop.f32.mrf.mxu0
    %v269 = vadd.f32 0.0, %v268
    %270 = vdwg.mxu0
    %271 = vmatpush.bf16.msra.mxu0 %v231
    %272 = vmatpush.bf16.msra.mxu0 %v228
    %273 = vmatpush.bf16.msra.mxu0 %v225
    %274 = vmatpush.bf16.msra.mxu0 %v222
    %275 = vmatpush.bf16.msra.mxu0 %v219
    %276 = vmatpush.bf16.msra.mxu0 %v216
    %277 = vmatpush.bf16.msra.mxu0 %v213
    %278 = vmatpush.bf16.msra.mxu0 %v210
    %279 = vmatmul.bf16.gmra.mxu0 %v127
    %v280 = vpop.f32.mrf.mxu0
    %v281 = vadd.f32 0.0, %v280
    %v282 = vpop.f32.mrf.mxu0
    %v283 = vadd.f32 0.0, %v282
    %284 = vdwg.mxu0
    %285 = vmatpush.bf16.msra.mxu0 %v232
    %286 = vmatpush.bf16.msra.mxu0 %v229
    %287 = vmatpush.bf16.msra.mxu0 %v226
    %288 = vmatpush.bf16.msra.mxu0 %v223
    %289 = vmatpush.bf16.msra.mxu0 %v220
    %290 = vmatpush.bf16.msra.mxu0 %v217
    %291 = vmatpush.bf16.msra.mxu0 %v214
    %292 = vmatpush.bf16.msra.mxu0 %v211
    %293 = vmatmul.bf16.gmra.mxu0 %v127
    %v294 = vpop.f32.mrf.mxu0
    %v295 = vadd.f32 0.0, %v294
    %v296 = vpop.f32.mrf.mxu0
    %v297 = vadd.f32 0.0, %v296
    %298 = vdwg.mxu0
    %v299 = vld [vmem:[#allocation4] sm:$0xff]
    %v300 = vld [vmem:[#allocation4 + $0x8] sm:$0xf]
    %v301 = vld [vmem:[#allocation4 + $0xc] sm:$0xff]
    %v302 = vld [vmem:[#allocation4 + $0x14] sm:$0xf]
    %v303 = vld [vmem:[#allocation4 + $0x18] sm:$0xff]
    %v304 = vld [vmem:[#allocation4 + $0x20] sm:$0xf]
    %v305 = vld [vmem:[#allocation4 + $0x24] sm:$0xff]
    %v306 = vld [vmem:[#allocation4 + $0x2c] sm:$0xf]
    %v307 = vld [vmem:[#allocation4 + $0x30] sm:$0xff]
    %v308 = vld [vmem:[#allocation4 + $0x38] sm:$0xf]
    %v309 = vld [vmem:[#allocation4 + $0x3c] sm:$0xff]
    %v310 = vld [vmem:[#allocation4 + $0x44] sm:$0xf]
    %v311 = vld [vmem:[#allocation4 + $0x48] sm:$0xff]
    %v312 = vld [vmem:[#allocation4 + $0x50] sm:$0xf]
    %v313 = vld [vmem:[#allocation4 + $0x54] sm:$0xff]
    %v314 = vld [vmem:[#allocation4 + $0x5c] sm:$0xf]
    %v315 = vld [vmem:[#allocation4 + $0x60] sm:$0xff]
    %v316 = vld [vmem:[#allocation4 + $0x68] sm:$0xf]
    %v317 = vld [vmem:[#allocation4 + $0x6c] sm:$0xff]
    %v318 = vld [vmem:[#allocation4 + $0x74] sm:$0xf]
    %v319 = vld [vmem:[#allocation4 + $0x78] sm:$0xff]
    %v320 = vld [vmem:[#allocation4 + $0x80] sm:$0xf]
    %v321 = vld [vmem:[#allocation4 + $0x84] sm:$0xff]
    %v322 = vld [vmem:[#allocation4 + $0x8c] sm:$0xf]
    %v323 = vld [vmem:[#allocation4 + $0x90] sm:$0xff]
    %v324 = vld [vmem:[#allocation4 + $0x98] sm:$0xf]
    %v325 = vld [vmem:[#allocation4 + $0x9c] sm:$0xff]
    %v326 = vld [vmem:[#allocation4 + $0xa4] sm:$0xf]
    %v327 = vld [vmem:[#allocation4 + $0xa8] sm:$0xff]
    %v328 = vld [vmem:[#allocation4 + $0xb0] sm:$0xf]
    %v329 = vld [vmem:[#allocation4 + $0xb4] sm:$0xff]
    %v330 = vld [vmem:[#allocation4 + $0xbc] sm:$0xf]
    %v333 = vunpack.c.l.b16 %v71
    %v334 = vunpack.c.l.b16 %v72
    %v335 = vpack.c.b16 %v334, %v333
    %v369 = vunpack.c.l.b16 %v299
    %v370 = vunpack.c.h.b16 %v299
    %v371 = vunpack.c.l.b16 %v300
    %v372 = vunpack.c.l.b16 %v301
    %v373 = vunpack.c.h.b16 %v301
    %v374 = vunpack.c.l.b16 %v302
    %v375 = vunpack.c.l.b16 %v303
    %v376 = vunpack.c.h.b16 %v303
    %v377 = vunpack.c.l.b16 %v304
    %v378 = vunpack.c.l.b16 %v305
    %v379 = vunpack.c.h.b16 %v305
    %v380 = vunpack.c.l.b16 %v306
    %v381 = vunpack.c.l.b16 %v307
    %v382 = vunpack.c.h.b16 %v307
    %v383 = vunpack.c.l.b16 %v308
    %v384 = vunpack.c.l.b16 %v309
    %v385 = vunpack.c.h.b16 %v309
    %v386 = vunpack.c.l.b16 %v310
    %v387 = vunpack.c.l.b16 %v311
    %v388 = vunpack.c.h.b16 %v311
    %v389 = vunpack.c.l.b16 %v312
    %v390 = vunpack.c.l.b16 %v313
    %v391 = vunpack.c.h.b16 %v313
    %v392 = vunpack.c.l.b16 %v314
    %v393 = vunpack.c.l.b16 %v315
    %v394 = vunpack.c.h.b16 %v315
    %v395 = vunpack.c.l.b16 %v316
    %v396 = vunpack.c.l.b16 %v317
    %v397 = vunpack.c.h.b16 %v317
    %v398 = vunpack.c.l.b16 %v318
    %v399 = vunpack.c.l.b16 %v319
    %v400 = vunpack.c.h.b16 %v319
    %v401 = vunpack.c.l.b16 %v320
    %v402 = vunpack.c.l.b16 %v321
    %v403 = vunpack.c.h.b16 %v321
    %v404 = vunpack.c.l.b16 %v322
    %v405 = vunpack.c.l.b16 %v323
    %v406 = vunpack.c.h.b16 %v323
    %v407 = vunpack.c.l.b16 %v324
    %v408 = vunpack.c.l.b16 %v325
    %v409 = vunpack.c.h.b16 %v325
    %v410 = vunpack.c.l.b16 %v326
    %v411 = vunpack.c.l.b16 %v327
    %v412 = vunpack.c.h.b16 %v327
    %v413 = vunpack.c.l.b16 %v328
    %v414 = vunpack.c.l.b16 %v329
    %v415 = vunpack.c.h.b16 %v329
    %v416 = vunpack.c.l.b16 %v330
    %v417 = vpack.c.b16 %v372, %v369
    %v418 = vpack.c.b16 %v373, %v370
    %v419 = vpack.c.b16 %v374, %v371
    %v420 = vpack.c.b16 %v378, %v375
    %v421 = vpack.c.b16 %v379, %v376
    %v422 = vpack.c.b16 %v380, %v377
    %v423 = vpack.c.b16 %v384, %v381
    %v424 = vpack.c.b16 %v385, %v382
    %v425 = vpack.c.b16 %v386, %v383
    %v426 = vpack.c.b16 %v390, %v387
    %v427 = vpack.c.b16 %v391, %v388
    %v428 = vpack.c.b16 %v392, %v389
    %v429 = vpack.c.b16 %v396, %v393
    %v430 = vpack.c.b16 %v397, %v394
    %v431 = vpack.c.b16 %v398, %v395
    %v432 = vpack.c.b16 %v402, %v399
    %v433 = vpack.c.b16 %v403, %v400
    %v434 = vpack.c.b16 %v404, %v401
    %v435 = vpack.c.b16 %v408, %v405
    %v436 = vpack.c.b16 %v409, %v406
    %v437 = vpack.c.b16 %v410, %v407
    %v438 = vpack.c.b16 %v414, %v411
    %v439 = vpack.c.b16 %v415, %v412
    %v440 = vpack.c.b16 %v416, %v413
    %465 = vmatpush.bf16.msra.mxu0 %v438
    %466 = vmatpush.bf16.msra.mxu0 %v435
    %467 = vmatpush.bf16.msra.mxu0 %v432
    %468 = vmatpush.bf16.msra.mxu0 %v429
    %469 = vmatpush.bf16.msra.mxu0 %v426
    %470 = vmatpush.bf16.msra.mxu0 %v423
    %471 = vmatpush.bf16.msra.mxu0 %v420
    %472 = vmatpush.bf16.msra.mxu0 %v417
    %473 = vmatmul.bf16.gmra.mxu0 %v335
    %v474 = vpop.f32.mrf.mxu0
    %v475 = vadd.f32 0.0, %v474
    %v476 = vpop.f32.mrf.mxu0
    %v477 = vadd.f32 0.0, %v476
    %478 = vdwg.mxu0
    %479 = vmatpush.bf16.msra.mxu0 %v439
    %480 = vmatpush.bf16.msra.mxu0 %v436
    %481 = vmatpush.bf16.msra.mxu0 %v433
    %482 = vmatpush.bf16.msra.mxu0 %v430
    %483 = vmatpush.bf16.msra.mxu0 %v427
    %484 = vmatpush.bf16.msra.mxu0 %v424
    %485 = vmatpush.bf16.msra.mxu0 %v421
    %486 = vmatpush.bf16.msra.mxu0 %v418
    %487 = vmatmul.bf16.gmra.mxu0 %v335
    %v488 = vpop.f32.mrf.mxu0
    %v489 = vadd.f32 0.0, %v488
    %v490 = vpop.f32.mrf.mxu0
    %v491 = vadd.f32 0.0, %v490
    %492 = vdwg.mxu0
    %493 = vmatpush.bf16.msra.mxu0 %v440
    %494 = vmatpush.bf16.msra.mxu0 %v437
    %495 = vmatpush.bf16.msra.mxu0 %v434
    %496 = vmatpush.bf16.msra.mxu0 %v431
    %497 = vmatpush.bf16.msra.mxu0 %v428
    %498 = vmatpush.bf16.msra.mxu0 %v425
    %499 = vmatpush.bf16.msra.mxu0 %v422
    %500 = vmatpush.bf16.msra.mxu0 %v419
    %501 = vmatmul.bf16.gmra.mxu0 %v335
    %v502 = vpop.f32.mrf.mxu0
    %v503 = vadd.f32 0.0, %v502
    %v504 = vpop.f32.mrf.mxu0
    %v505 = vadd.f32 0.0, %v504
    %506 = vdwg.mxu0
    %v507 = vadd.f32 %v267, %v475
    %v508 = vadd.f32 %v269, %v477
    %v509 = vld [vmem:[%s6] sm:$0x1]
    %v511 = vperm.slane %v509, 0
    %v513 = vadd.f32 %v507, %v511
    %v514 = vadd.f32 %v508, %v511
    %v515 = vxor.u32 %v513, 2147483648
    %v516 = vxor.u32 %v514, 2147483648
    %v517 = vmul.f32 %v515, 1.442695
    %v518 = vpow.pop %v517
    %v519 = vmul.f32 %v516, 1.442695
    %v520 = vpow.pop %v519
    %v521 = vadd.f32 %v518, 1.0
    %v522 = vadd.f32 %v520, 1.0
    %v523 = vrcp.pop %v521
    %v524 = vmul.f32 %v521, %v523
    %v525 = vsub.f32 1.0, %v524
    %v526 = vmul.f32 %v523, %v525
    %v527 = vadd.f32 %v523, %v526
    %vm528 = vweird.f32 %v521
    %vm529 = vweird.f32 %v523
    %vm530 = vmor %vm528, %vm529
    %v531 = vsel %vm530, %v523, %v527
    %v532 = vand.u32 2147483647, %v521
    %vm533 = vcmp.eq.f32.partialorder %v532, 8.507059e+37
    %v534 = vand.u32 %v521, 2147483648
    %v535 = vor.u32 1.1754944e-38, %v534
    %v536 = vsel %vm533, %v535, %v531
    %v537 = vmul.f32 1.0, %v536
    %v538 = vrcp.pop %v522
    %v539 = vmul.f32 %v522, %v538
    %v540 = vsub.f32 1.0, %v539
    %v541 = vmul.f32 %v538, %v540
    %v542 = vadd.f32 %v538, %v541
    %vm543 = vweird.f32 %v522
    %vm544 = vweird.f32 %v538
    %vm545 = vmor %vm543, %vm544
    %v546 = vsel %vm545, %v538, %v542
    %v547 = vand.u32 2147483647, %v522
    %vm548 = vcmp.eq.f32.partialorder %v547, 8.507059e+37
    %v549 = vand.u32 %v522, 2147483648
    %v550 = vor.u32 1.1754944e-38, %v549
    %v551 = vsel %vm548, %v550, %v546
    %v552 = vmul.f32 1.0, %v551
    %v553 = vadd.f32 %v281, %v489
    %v554 = vadd.f32 %v283, %v491
    %v555 = vld [vmem:[%s7] sm:$0x1]
    %v557 = vperm.slane %v555, 0
    %v559 = vadd.f32 %v553, %v557
    %v560 = vadd.f32 %v554, %v557
    %v561 = vxor.u32 %v559, 2147483648
    %v562 = vxor.u32 %v560, 2147483648
    %v563 = vmul.f32 %v561, 1.442695
    %v564 = vpow.pop %v563
    %v565 = vmul.f32 %v562, 1.442695
    %v566 = vpow.pop %v565
    %v567 = vadd.f32 %v564, 1.0
    %v568 = vadd.f32 %v566, 1.0
    %v569 = vrcp.pop %v567
    %v570 = vmul.f32 %v567, %v569
    %v571 = vsub.f32 1.0, %v570
    %v572 = vmul.f32 %v569, %v571
    %v573 = vadd.f32 %v569, %v572
    %vm574 = vweird.f32 %v567
    %vm575 = vweird.f32 %v569
    %vm576 = vmor %vm574, %vm575
    %v577 = vsel %vm576, %v569, %v573
    %v578 = vand.u32 2147483647, %v567
    %vm579 = vcmp.eq.f32.partialorder %v578, 8.507059e+37
    %v580 = vand.u32 %v567, 2147483648
    %v581 = vor.u32 1.1754944e-38, %v580
    %v582 = vsel %vm579, %v581, %v577
    %v583 = vmul.f32 1.0, %v582
    %v584 = vrcp.pop %v568
    %v585 = vmul.f32 %v568, %v584
    %v586 = vsub.f32 1.0, %v585
    %v587 = vmul.f32 %v584, %v586
    %v588 = vadd.f32 %v584, %v587
    %vm589 = vweird.f32 %v568
    %vm590 = vweird.f32 %v584
    %vm591 = vmor %vm589, %vm590
    %v592 = vsel %vm591, %v584, %v588
    %v593 = vand.u32 2147483647, %v568
    %vm594 = vcmp.eq.f32.partialorder %v593, 8.507059e+37
    %v595 = vand.u32 %v568, 2147483648
    %v596 = vor.u32 1.1754944e-38, %v595
    %v597 = vsel %vm594, %v596, %v592
    %v598 = vmul.f32 1.0, %v597
    %v599 = vld [vmem:[%s8] sm:$0x1]
    %v601 = vperm.slane %v599, 0
    %v603 = vadd.f32 %v295, %v601
    %v604 = vadd.f32 %v297, %v601
    %v605 = vld [vmem:[%s9] sm:$0x1]
    %v607 = vperm.slane %v605, 0
    %v609 = vadd.f32 %v503, %v607
    %v610 = vadd.f32 %v505, %v607
    %v611 = vmul.f32 %v537, %v609
    %v612 = vmul.f32 %v552, %v610
    %v613 = vadd.f32 %v603, %v611
    %v614 = vadd.f32 %v604, %v612
    %v615 = vtanh.pop %v613
    %v616 = vtanh.pop %v614
    %v617 = vunpack.c.l.bf16 %v71
    %v618 = vunpack.c.l.bf16 %v72
    %v619 = vsub.f32 %v617, %v615
    %v620 = vsub.f32 %v618, %v616
    %v621 = vmul.f32 %v583, %v619
    %v622 = vmul.f32 %v598, %v620
    %v623 = vadd.f32 %v615, %v621
    %v624 = vadd.f32 %v616, %v622
    %v625 = vpack.c.bf16 %v623, %v623
    %v626 = vpack.c.bf16 %v624, %v624
    %627 = vst [vmem:[%s10] sm:$0xf] %v625
    %628 = vst [vmem:[%s10 + $0x4] sm:$0xf] %v626
    // Predicated region
    $region50: #{gru_obs_cell.1} parent=1 // pred_check
      _
    $region51: #{gru_obs_cell.1} parent=1 // pred_check_branch
      %630 = sbr.rel (0) target = $region53
    $region52: #{gru_obs_cell.1} parent=1 // pred_region
      _
    $region53: #{gru_obs_cell.1} parent=1 // pred_fallthru
      _
    // Predicated region
    $region54: #{gru_obs_cell.1} parent=1 // pred_check
      _
    $region55: #{gru_obs_cell.1} parent=1 // pred_check_branch
      %632 = sbr.rel (0) target = $region57
    $region56: #{gru_obs_cell.1} parent=1 // pred_region
      _
    $region57: #{gru_obs_cell.1} parent=1 // pred_fallthru
      _
    // Predicated region
    $region58: #{gru_obs_cell.1} parent=1 // pred_check
      _
    $region59: #{gru_obs_cell.1} parent=1 // pred_check_branch
      %634 = sbr.rel (0) target = $region61
    $region60: #{gru_obs_cell.1} parent=1 // pred_region
      _
    $region61: #{gru_obs_cell.1} parent=1 // pred_fallthru
      _
    // Predicated region
    $region62: #{gru_obs_cell.1} parent=1 // pred_check
      _
    $region63: #{gru_obs_cell.1} parent=1 // pred_check_branch
      %636 = sbr.rel (0) target = $region65
    $region64: #{gru_obs_cell.1} parent=1 // pred_region
      _
    $region65: #{gru_obs_cell.1} parent=1 // pred_fallthru
      _
    %637 = vsyncpa [#allocation3], 1
    %638 = vsyncpa [#allocation5], 1

</llo_original>
